<compile_context>
chip_gen: v7x
topology: tpu7x:2x2x1
jax: 0.10.0
libtpu: 0.0.40
codegen_flags: <defaults>
</compile_context>

<pallas_src>
import functools
import math

import jax
import jax.numpy as jnp
from jax.experimental import pallas as pl
from jax.experimental.pallas import tpu as pltpu


def _strip_att_kernel(x_ref, chan_ref, lane_ref, o_ref, *, shifts, width, rows):
    """One (C, rows*width) block of one sample; the strip axis is the lane axis
    with `rows` strips of length `width` folded into it.

    x_ref:    (C, L) input block, L = rows * width.
    chan_ref: (C, T+1) f32. Columns 0..T-1: per-tap scales
              (tanh(conv(gap(x))) * (inside_all+1) * lamb_l, with lamb_h+1
              folded into the d==0 tap).  Column T: inside_all*lamb_l/width.
    lane_ref: (2, L) int32: row 0 = position within the strip,
              row 1 = local strip (row) index.
    """
    f32 = jnp.float32
    xr = x_ref[...]                                   # (C, L), input dtype
    T = len(shifts)

    ch = chan_ref[...].astype(f32)                    # (C, T+1)
    ids = lane_ref[...]                               # (2, L) int32
    w_idx = ids[0:1, :]                               # (1, L) position in strip
    row_idx = ids[1:2, :]                             # (1, L) local row id

    # shift -> rolled copy cache; rolls (XLU) are shared between main taps and
    # the reflection border fix-ups.
    cache = {}
    L = xr.shape[-1]

    def shifted(off):
        """y[c, j] = x[c, j + off]  (all offsets stay inside one strip)."""
        s = (-off) % L
        if s == 0:
            return xr
        if s not in cache:
            cache[s] = pltpu.roll(xr, s, 1)
        return cache[s]

    acc = None
    for t, d in enumerate(shifts):
        tap = shifted(d)
        if d > 0:
            # positions w >= width-d reflect: source w' = 2*width - 2 - w - d
            for m in range(d):
                fix = shifted(d - 2 - 2 * m)
                tap = jnp.where(w_idx == (width - d + m), fix, tap)
        elif d < 0:
            # positions w < -d reflect: source w' = -w - d
            p = -d
            for m in range(p):
                fix = shifted(p - 2 * m)
                tap = jnp.where(w_idx == m, fix, tap)
        term = tap.astype(f32) * ch[:, t:t + 1]
        acc = term if acc is None else acc + term

    # Strip-wise mean of the identity input, broadcast back over the strip and
    # scaled by inside_all*lamb_l/width (folded into ch[:, T]).  Two small MXU
    # matmuls against a 0/1 row selector (no cross-lane VPU/XLU work).
    sel = (jax.lax.broadcasted_iota(jnp.int32, (rows, L), 0)
           == row_idx).astype(f32)                    # (rows, L)
    xg = xr.astype(f32)
    row_sum = jax.lax.dot_general(
        xg, sel, (((1,), (1,)), ((), ())), preferred_element_type=f32)  # (C, rows)
    gterm = jnp.dot(row_sum * ch[:, T:T + 1], sel,
                    preferred_element_type=f32)       # (C, L)

    o_ref[...] = (acc - gterm).astype(o_ref.dtype)


def _vmem_capacity_bytes():
    try:
        info = pltpu.get_tpu_info()
        cap = getattr(info, "vmem_capacity_bytes", None)
        if cap:
            return int(cap)
    except Exception:
        pass
    return 64 * 1024 * 1024


def _pick_row_block(rows, width, C, N, target_bytes):
    """Largest divisor of `rows` keeping the block lane-aligned (multiple of
    128 lanes) and within the VMEM budget (x block + in-kernel row selector)."""
    r_quant = 128 // math.gcd(width, 128)

    def cost(r):
        return C * r * width * 4 + 8 * r * r * width

    cands = [r for r in range(r_quant, rows + 1, r_quant)
             if rows % r == 0 and cost(r) <= target_bytes]
    if N == 1:                      # keep >= 2 grid blocks for 2-TC chips (v7x)
        multi = [r for r in cands if r < rows]
        if multi:
            cands = multi
    if cands:
        return max(cands)
    alt = [r for r in range(r_quant, rows, r_quant) if rows % r == 0]
    return min(alt) if alt else rows


def _forward_lane_strip(x4, conv_weight, inside_all, lamb_l, lamb_h, *,
                        kernel, dilation, group,
                        target_block_bytes, vmem_limit_bytes):
    """x4: (N, C, R, W); the strip axis is the LAST axis (length W)."""
    N, C, R, W = x4.shape
    K = kernel
    GK = group * K
    pad = dilation * (K - 1) // 2
    Cg = C // group
    L = R * W
    f32 = jnp.float32

    assert C % group == 0, "C must be divisible by group"
    assert (dilation * (K - 1)) % 2 == 0, (
        "dilation*(kernel-1) must be even (required by the PyTorch module)")
    assert pad < W, "reflection pad must be smaller than the strip length"

    shifts = [k * dilation - pad for k in range(K)]

    # --- hoisted whole-sample dependency: tanh(1x1conv(GAP(x))) -------------
    gap_nc = jnp.mean(x4.astype(f32), axis=(2, 3))                   # (N, C)
    wmat = conv_weight.reshape(GK, C).astype(f32)
    filt = jnp.tanh(gap_nc @ wmat.T)                                 # (N, GK)
    per_tap = jnp.repeat(filt.reshape(N, group, K), Cg, axis=1)      # (N, C, K)

    inside = inside_all.reshape(C).astype(f32)
    ll = lamb_l.reshape(C).astype(f32)
    lh = lamb_h.reshape(C).astype(f32)

    scale = per_tap * ((inside + 1.0) * ll)[None, :, None]           # (N, C, K)
    coef_h = lh + 1.0                                                # (C,)
    if 0 in shifts:                      # fold (lamb_h+1)*x into the d==0 tap
        scale = scale.at[:, :, shifts.index(0)].add(coef_h[None, :])
    else:                                # even kernel: add an explicit 0-shift tap
        shifts = shifts + [0]
        scale = jnp.concatenate(
            [scale, jnp.broadcast_to(coef_h[None, :, None], (N, C, 1))], axis=-1)
    T = len(shifts)
    coef_b = (inside * ll) * (1.0 / W)                               # strip-mean coeff
    chan = jnp.concatenate(
        [scale, jnp.broadcast_to(coef_b[None, :, None], (N, C, 1))],
        axis=-1).astype(f32)                                         # (N, C, T+1)

    # --- block sizing (generation aware) ------------------------------------
    offs = set()
    for d in shifts:
        if d:
            offs.add(d)
        if d > 0:
            offs.update(d - 2 - 2 * m for m in range(d))
        elif d < 0:
            offs.update((-d) - 2 * m for m in range(-d))
    offs.discard(0)
    n_roll = len(offs)

    vmem_cap = _vmem_capacity_bytes()
    if vmem_limit_bytes is None:
        vmem_limit_bytes = min(vmem_cap * 3 // 4, 112 * 1024 * 1024)
    if target_block_bytes is None:
        live = 8 + n_roll            # in/out double buffers + temps + roll cache
        target_block_bytes = max(1 * 1024 * 1024,
                                 min(8 * 1024 * 1024, vmem_limit_bytes // live))

    r_block = _pick_row_block(R, W, C, N, int(target_block_bytes))
    l_block = r_block * W
    grid = (N, R // r_block)

    # per-block lane descriptors (same for every block)
    w_ids = jnp.tile(jnp.arange(W, dtype=jnp.int32), r_block)
    r_ids = jnp.repeat(jnp.arange(r_block, dtype=jnp.int32), W)
    lane_ids = jnp.stack([w_ids, r_ids], axis=0)                     # (2, l_block)

    kern = functools.partial(_strip_att_kernel, shifts=tuple(shifts),
                             width=W, rows=r_block)

    out3 = pl.pallas_call(
        kern,
        out_shape=jax.ShapeDtypeStruct((N, C, L), x4.dtype),
        grid_spec=pltpu.PrefetchScalarGridSpec(
            num_scalar_prefetch=0,
            grid=grid,
            in_specs=[
                pl.BlockSpec((None, C, l_block), lambda n, ri: (n, 0, ri)),
                pl.BlockSpec((None, C, T + 1), lambda n, ri: (n, 0, 0)),
                pl.BlockSpec((2, l_block), lambda n, ri: (0, 0)),
            ],
            out_specs=pl.BlockSpec((None, C, l_block), lambda n, ri: (n, 0, ri)),
        ),
        compiler_params=pltpu.CompilerParams(
            dimension_semantics=("parallel", "parallel"),
            vmem_limit_bytes=int(vmem_limit_bytes),
        ),
    )(x4.reshape(N, C, L), chan, lane_ids)
    return out3.reshape(N, C, R, W)


def spatial_strip_att_forward(x, conv_weight, inside_all, lamb_l, lamb_h, *,
                              kernel=3, dilation=1, group=2, H=True,
                              target_block_bytes=None, vmem_limit_bytes=None):
    """Forward of `spatial_strip_att`.  x: (N, C, H, W) f32/bf16.
    conv_weight: (group*kernel, C[,1,1]); inside_all: (C,1,1) or (C,);
    lamb_l, lamb_h: (C,)."""
    if not H:
        # TODO(synk): a dedicated sublane-strip kernel would avoid these two HBM
        # transposes; H=False is the non-default configuration of the module.
        xt = jnp.transpose(x, (0, 1, 3, 2))
        out = _forward_lane_strip(xt, conv_weight, inside_all, lamb_l, lamb_h,
                                  kernel=kernel, dilation=dilation, group=group,
                                  target_block_bytes=target_block_bytes,
                                  vmem_limit_bytes=vmem_limit_bytes)
        return jnp.transpose(out, (0, 1, 3, 2))
    return _forward_lane_strip(x, conv_weight, inside_all, lamb_l, lamb_h,
                               kernel=kernel, dilation=dilation, group=group,
                               target_block_bytes=target_block_bytes,
                               vmem_limit_bytes=vmem_limit_bytes)


def reference_forward(x, conv_weight, inside_all, lamb_l, lamb_h,
                      kernel, dilation, group, H=True):
    """Pure-JAX port of the PyTorch forward (both H=True and H=False)."""
    n, c, h, w = x.shape
    pad = dilation * (kernel - 1) // 2
    cg = c // group
    f32 = jnp.float32
    xf = x.astype(f32)
    gap = jnp.mean(xf, axis=(2, 3))                                  # (n, c)
    wmat = conv_weight.reshape(group * kernel, c).astype(f32)
    filt = jnp.tanh(gap @ wmat.T)                                    # (n, GK)
    axis = 3 if H else 2
    pad_cfg = [(0, 0)] * 4
    pad_cfg[axis] = (pad, pad)
    xp = jnp.pad(xf, pad_cfg, mode="reflect")
    outs = []
    for g in range(group):
        acc = jnp.zeros((n, cg, h, w), f32)
        for k in range(kernel):
            if H:
                sl = xp[:, g * cg:(g + 1) * cg, :, k * dilation:k * dilation + w]
            else:
                sl = xp[:, g * cg:(g + 1) * cg, k * dilation:k * dilation + h, :]
            acc = acc + sl * filt[:, g * kernel + k][:, None, None, None]
        outs.append(acc)
    out = jnp.concatenate(outs, axis=1)                              # (n, c, h, w)
    inside = inside_all.reshape(1, c, 1, 1).astype(f32)
    gap_strip = jnp.mean(xf, axis=axis, keepdims=True)
    out_low = (out * (inside + 1.0) - inside * gap_strip) * lamb_l.reshape(1, c, 1, 1)
    out_high = xf * (lamb_h.reshape(1, c, 1, 1) + 1.0)
    return out_low + out_high


if __name__ == "__main__":
    def make_params(C, kernel, group, key):
        k1, k2, k3, k4 = jax.random.split(key, 4)
        conv_w = 0.5 * jax.random.normal(k1, (group * kernel, C, 1, 1), jnp.float32)
        inside = 0.1 * jax.random.normal(k2, (C, 1, 1), jnp.float32)
        lamb_l = 0.1 * jax.random.normal(k3, (C,), jnp.float32)
        lamb_h = 0.1 * jax.random.normal(k4, (C,), jnp.float32)
        return conv_w, inside, lamb_l, lamb_h

    def run_case(shape, kernel, dilation, group, H, key,
                 dtype=jnp.float32, tol=2e-4, **kw):
        kx, kp = jax.random.split(key)
        N, C, Hd, Wd = shape
        x = jax.random.normal(kx, shape, jnp.float32).astype(dtype)
        conv_w, inside, lamb_l, lamb_h = make_params(C, kernel, group, kp)
        out = spatial_strip_att_forward(x, conv_w, inside, lamb_l, lamb_h,
                                        kernel=kernel, dilation=dilation,
                                        group=group, H=H, **kw)
        out = jax.block_until_ready(out)
        assert out.shape == shape and out.dtype == dtype
        ref = reference_forward(x, conv_w, inside, lamb_l, lamb_h,
                                kernel, dilation, group, H)
        err = float(jnp.max(jnp.abs(out.astype(jnp.float32) - ref)))
        assert err < tol, (f"max abs err {err} for shape={shape} k={kernel} "
                           f"dil={dilation} H={H} dtype={dtype}")

    key = jax.random.PRNGKey(0)
    ks = jax.random.split(key, 5)
    # default module config, single row-block per sample
    run_case((2, 4, 16, 16), 3, 1, 2, True, ks[0])
    # large kernel + dilation (pad=4), forced multi-block grid over rows
    run_case((2, 8, 16, 128), 5, 2, 2, True, ks[1], target_block_bytes=32 * 1024)
    # H=False path (strip along H), validated against a direct reference
    run_case((2, 4, 24, 16), 3, 1, 2, False, ks[2])
    # even kernel size (no centre tap -> explicit 0-shift tap for lamb_h+1)
    run_case((2, 4, 16, 32), 4, 2, 2, True, ks[3])
    # bf16 input: rolls/selects in bf16, f32 accumulation
    run_case((2, 4, 16, 16), 3, 1, 2, True, ks[4], dtype=jnp.bfloat16, tol=6e-2)
    print("KERNEL_OK")
</pallas_src>

<mosaic_0001>
module attributes {stable_mosaic.version = 11 : i64} {
  func.func @_strip_att_kernel(%arg0: i32, %arg1: i32, %arg2: memref<1x4x256xf32, #tpu.memory_space<vmem>>, %arg3: memref<1x4x4xf32, #tpu.memory_space<vmem>>, %arg4: memref<2x256xi32, #tpu.memory_space<vmem>>, %arg5: memref<1x4x256xf32, #tpu.memory_space<vmem>>) attributes {dimension_semantics = [#tpu.dimension_semantics<parallel>, #tpu.dimension_semantics<parallel>], iteration_bounds = array<i64: 2, 1>, scalar_prefetch = 0 : i64, scratch_operands = 0 : i64, tpu.core_type = #tpu.core_type<tc>, window_params = [{transform_indices = @transform_0, window_bounds = array<i64: 1, 4, 256>}, {transform_indices = @transform_1, window_bounds = array<i64: 1, 4, 4>}, {pipeline_mode = #tpu.pipeline_mode<synchronous>, transform_indices = @transform_2, window_bounds = array<i64: 2, 256>}, {transform_indices = @transform_3, window_bounds = array<i64: 1, 4, 256>}]} {
    %c0 = arith.constant 0 : index
    %c0_0 = arith.constant 0 : index
    %c0_1 = arith.constant 0 : index
    %0 = vector.load %arg2[%c0, %c0_0, %c0_1] : memref<1x4x256xf32, #tpu.memory_space<vmem>>, vector<1x4x256xf32>
    %1 = vector.shape_cast %0 : vector<1x4x256xf32> to vector<4x256xf32>
    %c0_2 = arith.constant 0 : index
    %c0_3 = arith.constant 0 : index
    %c0_4 = arith.constant 0 : index
    %2 = vector.load %arg3[%c0_2, %c0_3, %c0_4] : memref<1x4x4xf32, #tpu.memory_space<vmem>>, vector<1x4x4xf32>
    %3 = vector.shape_cast %2 : vector<1x4x4xf32> to vector<4x4xf32>
    %c0_5 = arith.constant 0 : index
    %c0_6 = arith.constant 0 : index
    %4 = vector.load %arg4[%c0_5, %c0_6] : memref<2x256xi32, #tpu.memory_space<vmem>>, vector<2x256xi32>
    %5 = vector.extract_strided_slice %4 {offsets = [0, 0], sizes = [1, 256], strides = [1, 1]} : vector<2x256xi32> to vector<1x256xi32>
    %6 = vector.extract_strided_slice %4 {offsets = [1, 0], sizes = [1, 256], strides = [1, 1]} : vector<2x256xi32> to vector<1x256xi32>
    %c1_i32 = arith.constant 1 : i32
    %7 = tpu.dynamic_rotate %1 by %c1_i32 dim 1 : vector<4x256xf32>, i32 -> vector<4x256xf32>
    %c255_i32 = arith.constant 255 : i32
    %8 = tpu.dynamic_rotate %1 by %c255_i32 dim 1 : vector<4x256xf32>, i32 -> vector<4x256xf32>
    %c0_i32 = arith.constant 0 : i32
    %9 = vector.broadcast %c0_i32 : i32 to vector<1x256xi32>
    %10 = arith.cmpi eq, %5, %9 : vector<1x256xi32>
    %11 = vector.shape_cast %10 : vector<1x256xi1> to vector<1x256xi1>
    %12 = vector.broadcast %11 : vector<1x256xi1> to vector<4x256xi1>
    %13 = arith.select %12, %8, %7 : vector<4x256xi1>, vector<4x256xf32>
    %14 = vector.extract_strided_slice %3 {offsets = [0, 0], sizes = [4, 1], strides = [1, 1]} : vector<4x4xf32> to vector<4x1xf32>
    %15 = vector.broadcast %14 : vector<4x1xf32> to vector<4x256xf32>
    %16 = arith.mulf %13, %15 : vector<4x256xf32>
    %17 = vector.extract_strided_slice %3 {offsets = [0, 1], sizes = [4, 1], strides = [1, 1]} : vector<4x4xf32> to vector<4x1xf32>
    %18 = vector.broadcast %17 : vector<4x1xf32> to vector<4x256xf32>
    %19 = arith.mulf %1, %18 : vector<4x256xf32>
    %20 = arith.addf %16, %19 : vector<4x256xf32>
    %c15_i32 = arith.constant 15 : i32
    %21 = vector.broadcast %c15_i32 : i32 to vector<1x256xi32>
    %22 = arith.cmpi eq, %5, %21 : vector<1x256xi32>
    %23 = vector.shape_cast %22 : vector<1x256xi1> to vector<1x256xi1>
    %24 = vector.broadcast %23 : vector<1x256xi1> to vector<4x256xi1>
    %25 = arith.select %24, %7, %8 : vector<4x256xi1>, vector<4x256xf32>
    %26 = vector.extract_strided_slice %3 {offsets = [0, 2], sizes = [4, 1], strides = [1, 1]} : vector<4x4xf32> to vector<4x1xf32>
    %27 = vector.broadcast %26 : vector<4x1xf32> to vector<4x256xf32>
    %28 = arith.mulf %25, %27 : vector<4x256xf32>
    %29 = arith.addf %20, %28 : vector<4x256xf32>
    %30 = tpu.iota {dimensions = array<i32: 0>} : vector<16x256xi32>
    %31 = vector.broadcast %6 : vector<1x256xi32> to vector<16x256xi32>
    %32 = arith.cmpi eq, %30, %31 : vector<16x256xi32>
    %33 = arith.extui %32 : vector<16x256xi1> to vector<16x256xi32>
    %34 = arith.sitofp %33 : vector<16x256xi32> to vector<16x256xf32>
    %cst = arith.constant dense<0.000000e+00> : vector<4x16xf32>
    %35 = tpu.matmul %1, %34, %cst {dimension_numbers = #tpu.dot_dimension_numbers<[1], [1], [0], [0], [0, 0, 1, 0], [], []>} : vector<4x256xf32>, vector<16x256xf32>, vector<4x16xf32> -> vector<4x16xf32>
    %36 = vector.extract_strided_slice %3 {offsets = [0, 3], sizes = [4, 1], strides = [1, 1]} : vector<4x4xf32> to vector<4x1xf32>
    %37 = vector.broadcast %36 : vector<4x1xf32> to vector<4x16xf32>
    %38 = arith.mulf %35, %37 : vector<4x16xf32>
    %cst_7 = arith.constant dense<0.000000e+00> : vector<4x256xf32>
    %39 = tpu.matmul %38, %34, %cst_7 {dimension_numbers = #tpu.dot_dimension_numbers<[1], [0], [0], [1], [0, 0, 1, 1], [], []>} : vector<4x16xf32>, vector<16x256xf32>, vector<4x256xf32> -> vector<4x256xf32>
    %40 = arith.subf %29, %39 : vector<4x256xf32>
    %c0_8 = arith.constant 0 : index
    %c0_9 = arith.constant 0 : index
    %c0_10 = arith.constant 0 : index
    %41 = vector.load %arg5[%c0_8, %c0_9, %c0_10] : memref<1x4x256xf32, #tpu.memory_space<vmem>>, vector<1x4x256xf32>
    %42 = vector.shape_cast %41 : vector<1x4x256xf32> to vector<4x256xf32>
    %43 = vector.shape_cast %40 : vector<4x256xf32> to vector<1x4x256xf32>
    tpu.vector_store %arg5[%c0_8, %c0_9, %c0_10], %43 {strides = array<i32>} : memref<1x4x256xf32, #tpu.memory_space<vmem>>, vector<1x4x256xf32>,
    return
  }
  func.func @transform_0(%arg0: i32, %arg1: i32) -> (i32, i32, i32) {
    %c0_i32 = arith.constant 0 : i32
    %c0_i32_0 = arith.constant 0 : i32
    return %arg0, %c0_i32, %arg1 : i32, i32, i32
  }
  func.func @transform_1(%arg0: i32, %arg1: i32) -> (i32, i32, i32) {
    %c0_i32 = arith.constant 0 : i32
    %c0_i32_0 = arith.constant 0 : i32
    %c0_i32_1 = arith.constant 0 : i32
    return %arg0, %c0_i32, %c0_i32_0 : i32, i32, i32
  }
  func.func @transform_2(%arg0: i32, %arg1: i32) -> (i32, i32) {
    %c0_i32 = arith.constant 0 : i32
    %c0_i32_0 = arith.constant 0 : i32
    %c0_i32_1 = arith.constant 0 : i32
    return %c0_i32, %c0_i32_0 : i32, i32
  }
  func.func @transform_3(%arg0: i32, %arg1: i32) -> (i32, i32, i32) {
    %c0_i32 = arith.constant 0 : i32
    %c0_i32_0 = arith.constant 0 : i32
    return %arg0, %c0_i32, %arg1 : i32, i32, i32
  }
}

</mosaic_0001>

<llo_original>
// kernel: tpu_custom_call.1
$region0: #{tpu_custom_call.1}
  #allocation0 [shape = 'u32[]', space=smem, size = 0x4, offset = 0x4, fixed_abs, tag = 'smem constant byte address 0x4 - core index']
  #allocation1 [shape = 'u32[144,128]{1,0:T(1,128)}', space=vmem, size = 0x12000, scoped, tag = 'internal scratch']
  %s0 = inlined_call_operand.hbm [shape: f32[2,4,256], index: 0, kind: input, shape index: {}]
  %s1 = inlined_call_operand.hbm [shape: f32[2,4,4], index: 1, kind: input, shape index: {}]
  %s2 = inlined_call_operand.vmem [shape: s32[2,256], index: 2, kind: input, shape index: {}]
  %s3 = inlined_call_operand.hbm [shape: f32[2,4,256], index: 3, kind: output, shape index: {}]
  %s4 = sld [smem:[#allocation0]]
  $region53: #{tpu_custom_call.1} parent=0
    _
  %s6 = ssub.s32 1, %s4
  %s7 = scalar_select 0, %s6, %s4
  $region1: #{tpu_custom_call.1} parent=0
    #allocation2 [shape = 'u8[8192]{0}', space=vmem, size = 0x2000, scoped, tag = 'input window, operand 0']
    #allocation3 [shape = 's32[2]{0}', space=sflag, size = 0x8, scoped, tag = 'scoped memory for tpu_custom_call.1']
    #allocation4 [shape = 's32[2]{0}', space=sflag, size = 0x8, scoped, tag = 'scoped memory for tpu_custom_call.1']
    #allocation5 [shape = 'u8[4096]{0}', space=vmem, size = 0x1000, scoped, tag = 'input window, operand 1']
    #allocation6 [shape = 's32[2]{0}', space=sflag, size = 0x8, scoped, tag = 'scoped memory for tpu_custom_call.1']
    #allocation7 [shape = 'u8[8192]{0}', space=vmem, size = 0x2000, scoped, tag = 'output window, operand 0']
    %8 = vsyncpa [#allocation3], 0
    %s9 = scalar_lea.sflag [#allocation3], 1
    %10 = vsyncpa %s9, 0
    %11 = vsyncpa [#allocation6], 0
    %s12 = scalar_lea.sflag [#allocation6], 1
    %13 = vsyncpa %s12, 0
    %14 = vsyncpa [#allocation4], 0
    %s15 = scalar_lea.sflag [#allocation4], 1
    %16 = vsyncpa %s15, 0
    loop: start=0, step=1, limit=4
    $region2: #{tpu_custom_call.1} parent=1 // loop_pre_header
      _
    $region3: #{tpu_custom_call.1} parent=1 // loop_header
      %s18 = sphi 0, %s22
      %p19 = scmp.ge.s32.totalorder %s18, 4
      %s25 = sphi 0, %s37
      %s26 = sphi 0, %s33
      %s27 = sphi 0, %s25
      %s28 = sphi 0, %s26
      %s29 = sphi 0, %s27
      %s30 = sphi 0, %s28
      %s42 = sphi 0, %s44
      %s45 = sphi 0, %s42
      %s46 = sphi 0, %s45
      %s62 = sphi 0, %s46
      %s68 = sphi 0, %s70
      %s71 = sphi 0, %s68
      %s72 = sphi 0, %s71
      %s88 = sphi 0, %s72
      %s92 = sphi 0, %s92
      %s94 = sphi 0, %s92
      %s95 = sphi 0, %s94
      %s109 = sphi 0, %s95
      %s117 = sphi 0, %s119
      %s120 = sphi 0, %s117
      %s121 = sphi 0, %s120
      %s137 = sphi 0, %s121
    $region4: #{tpu_custom_call.1} parent=1 // loop_header_branch
      %21 = sbr.rel (%p19) target = $region8
    $region5: #{tpu_custom_call.1} parent=1 // loop_body
      %s23 = ssub.s32 %s18, 1
      %s24 = ssub.s32 %s18, 2
      %s31 = sadd.s32 1, %s26
      %p32 = scmp.ge.s32.totalorder %s31, 1
      %s33 = scalar_select %p32, 0, %s31
      %s34 = sadd.s32 1, %s25
      %s35 = scalar_select %p32, %s34, %s25
      %p36 = scmp.ge.s32.totalorder %s35, 2
      %s37 = scalar_select %p36, 0, %s35
      %s38 = ssub.s32 %s25, %s37
      %s39 = ssub.s32 %s26, %s33
      %s40 = sor.u32 %s38, %s39
      %p41 = scmp.eq.s32.totalorder %s40, 0
      %s43 = sadd.s32 %s42, 1
      %s44 = scalar_select %p41, %s42, %s43
      %p47 = pneg %p41
      %p48 = scmp.eq.s32.totalorder %s18, 1
      %p49 = por %p47, %p48
      %p50 = scmp.ne.s32.totalorder %s42, %s45
      %p51 = scmp.eq.s32.totalorder %s18, 0
      %p52 = por %p50, %p51
      %p53 = scmp.ne.s32.totalorder %s42, %s45
      %p54 = scmp.eq.s32.totalorder %s23, 1
      %p55 = por %p53, %p54
      %p56 = scmp.ne.s32.totalorder %s45, %s46
      %p57 = scmp.eq.s32.totalorder %s23, 0
      %p58 = por %p56, %p57
      %p59 = scmp.ne.s32.totalorder %s45, %s46
      %p60 = scmp.eq.s32.totalorder %s24, 1
      %p61 = por %p59, %p60
      %p63 = scmp.ne.s32.totalorder %s46, %s62
      %p64 = scmp.eq.s32.totalorder %s24, 0
      %p65 = por %p63, %p64
      %s66 = ssub.s32 %s25, %s37
      %p67 = scmp.eq.s32.totalorder %s66, 0
      %s69 = sadd.s32 %s68, 1
      %s70 = scalar_select %p67, %s68, %s69
      %p73 = pneg %p67
      %p74 = scmp.eq.s32.totalorder %s18, 1
      %p75 = por %p73, %p74
      %p76 = scmp.ne.s32.totalorder %s68, %s71
      %p77 = scmp.eq.s32.totalorder %s18, 0
      %p78 = por %p76, %p77
      %p79 = scmp.ne.s32.totalorder %s68, %s71
      %p80 = scmp.eq.s32.totalorder %s23, 1
      %p81 = por %p79, %p80
      %p82 = scmp.ne.s32.totalorder %s71, %s72
      %p83 = scmp.eq.s32.totalorder %s23, 0
      %p84 = por %p82, %p83
      %p85 = scmp.ne.s32.totalorder %s71, %s72
      %p86 = scmp.eq.s32.totalorder %s24, 1
      %p87 = por %p85, %p86
      %p89 = scmp.ne.s32.totalorder %s72, %s88
      %p90 = scmp.eq.s32.totalorder %s24, 0
      %p91 = por %p89, %p90
      %s93 = sadd.s32 %s92, 1
      %p96 = scmp.eq.s32.totalorder %s18, 1
      %p97 = scmp.ne.s32.totalorder %s92, %s94
      %p98 = scmp.eq.s32.totalorder %s18, 0
      %p99 = por %p97, %p98
      %p100 = scmp.ne.s32.totalorder %s92, %s94
      %p101 = scmp.eq.s32.totalorder %s23, 1
      %p102 = por %p100, %p101
      %p103 = scmp.ne.s32.totalorder %s94, %s95
      %p104 = scmp.eq.s32.totalorder %s23, 0
      %p105 = por %p103, %p104
      %p106 = scmp.ne.s32.totalorder %s94, %s95
      %p107 = scmp.eq.s32.totalorder %s24, 1
      %p108 = por %p106, %p107
      %p110 = scmp.ne.s32.totalorder %s95, %s109
      %p111 = scmp.eq.s32.totalorder %s24, 0
      %p112 = por %p110, %p111
      %s113 = ssub.s32 %s25, %s37
      %s114 = ssub.s32 %s26, %s33
      %s115 = sor.u32 %s113, %s114
      %p116 = scmp.eq.s32.totalorder %s115, 0
      %s118 = sadd.s32 %s117, 1
      %s119 = scalar_select %p116, %s117, %s118
      %p122 = pneg %p116
      %p123 = scmp.eq.s32.totalorder %s18, 1
      %p124 = por %p122, %p123
      %p125 = scmp.ne.s32.totalorder %s117, %s120
      %p126 = scmp.eq.s32.totalorder %s18, 0
      %p127 = por %p125, %p126
      %p128 = scmp.ne.s32.totalorder %s117, %s120
      %p129 = scmp.eq.s32.totalorder %s23, 1
      %p130 = por %p128, %p129
      %p131 = scmp.ne.s32.totalorder %s120, %s121
      %p132 = scmp.eq.s32.totalorder %s23, 0
      %p133 = por %p131, %p132
      %p134 = scmp.ne.s32.totalorder %s120, %s121
      %p135 = scmp.eq.s32.totalorder %s24, 1
      %p136 = por %p134, %p135
      %p138 = scmp.ne.s32.totalorder %s121, %s137
      %p139 = scmp.eq.s32.totalorder %s24, 0
      %p140 = por %p138, %p139
      %p141 = scmp.le.s32.totalorder 1, %s18
      %p142 = scmp.lt.s32.totalorder %s18, 3
      %p143 = pnand %p141, %p142
      %p144 = pneg %p143
      // Predicated region
      $region9: #{tpu_custom_call.1} parent=5 // pred_check
        _
      $region10: #{tpu_custom_call.1} parent=5 // pred_check_branch
        %146 = sbr.rel (%p143) target = $region12
      $region11: #{tpu_custom_call.1} parent=5 // pred_region
        %s147 = ssub.s32 %s18, 1
        // Predicated region
        $region13: #{tpu_custom_call.1} parent=11 // pred_check
          %p148 = pneg %p105
        $region14: #{tpu_custom_call.1} parent=11 // pred_check_branch
          %150 = sbr.rel (%p148) target = $region16
        $region15: #{tpu_custom_call.1} parent=11 // pred_region
          _
        $region16: #{tpu_custom_call.1} parent=11 // pred_fallthru
          _
      $region12: #{tpu_custom_call.1} parent=5 // pred_fallthru
        _
      %p151 = scmp.lt.s32.totalorder %s18, 2
      // Predicated region
      $region17: #{tpu_custom_call.1} parent=5 // pred_check
        %p152 = pneg %p151
      $region18: #{tpu_custom_call.1} parent=5 // pred_check_branch
        %154 = sbr.rel (%p152) target = $region20
      $region19: #{tpu_custom_call.1} parent=5 // pred_region
        // Predicated region
        $region21: #{tpu_custom_call.1} parent=19 // pred_check
          %p155 = pneg %p52
        $region22: #{tpu_custom_call.1} parent=19 // pred_check_branch
          %157 = sbr.rel (%p155) target = $region24
        $region23: #{tpu_custom_call.1} parent=19 // pred_region
          %s158 = sand.u32 %s42, 1
          %s159 = scalar_lea.sflag [#allocation3], %s158
          %s160 = sand.u32 %s42, 1
          %s161 = smul.addr %s160, 8
          %s162 = scalar_lea.vmem [#allocation2], %s161
          %s163 = smul.u32 2, %s26
          %s165 = ssub.s32 128, 128
          %166 = vsyncadd %s159, %s165
          %s167 = smul.addr %s25, 2
          %s168 = sadd.s32 %s163, %s167
          %s169 = smul.addr %s168, 64
          %s170 = scalar_lea.hbm %s0, %s169
          %s172 = sshll.u32 %s162, 4
          %s173 = int_to_ptr.vmem [resolvable:$true] %s172
          %175 = dma.hbm_to_vmem [thread:$0]  %s170, 128, %s173, %s159
        $region24: #{tpu_custom_call.1} parent=19 // pred_fallthru
          _
        // Predicated region
        $region25: #{tpu_custom_call.1} parent=19 // pred_check
          %p176 = pneg %p78
        $region26: #{tpu_custom_call.1} parent=19 // pred_check_branch
          %178 = sbr.rel (%p176) target = $region28
        $region27: #{tpu_custom_call.1} parent=19 // pred_region
          %s179 = sand.u32 %s68, 1
          %s180 = scalar_lea.sflag [#allocation6], %s179
          %s181 = sand.u32 %s68, 1
          %s182 = smul.addr %s181, 4
          %s183 = scalar_lea.vmem [#allocation5], %s182
          %s185 = ssub.s32 64, 64
          %186 = vsyncadd %s180, %s185
          %s187 = smul.addr %s25, 64
          %s188 = scalar_lea.hbm %s1, %s187
          %s190 = sshll.u32 %s183, 4
          %s191 = int_to_ptr.vmem [resolvable:$true] %s190
          %193 = dma.hbm_to_vmem [thread:$0]  %s188, 64, %s191, %s180
        $region28: #{tpu_custom_call.1} parent=19 // pred_fallthru
          _
      $region20: #{tpu_custom_call.1} parent=5 // pred_fallthru
        _
      %p194 = scmp.le.s32.totalorder 1, %s18
      %p195 = scmp.lt.s32.totalorder %s18, 3
      %p196 = pnand %p194, %p195
      %p197 = pneg %p196
      // Predicated region
      $region29: #{tpu_custom_call.1} parent=5 // pred_check
        _
      $region30: #{tpu_custom_call.1} parent=5 // pred_check_branch
        %199 = sbr.rel (%p196) target = $region32
      $region31: #{tpu_custom_call.1} parent=5 // pred_region
        %s200 = ssub.s32 %s18, 1
        %s201 = sand.u32 %s45, 1
        %s202 = scalar_lea.sflag [#allocation3], %s201
        %s203 = sand.u32 %s45, 1
        %s204 = smul.addr %s203, 8
        %s205 = scalar_lea.vmem [#allocation2], %s204
        // Predicated region
        $region33: #{tpu_custom_call.1} parent=31 // pred_check
          %p206 = pneg %p58
        $region34: #{tpu_custom_call.1} parent=31 // pred_check_branch
          %208 = sbr.rel (%p206) target = $region36
        $region35: #{tpu_custom_call.1} parent=31 // pred_region
          %209 = dma.done %s202, 128
        $region36: #{tpu_custom_call.1} parent=31 // pred_fallthru
          _
        %s210 = sand.u32 %s71, 1
        %s211 = scalar_lea.sflag [#allocation6], %s210
        %s212 = sand.u32 %s71, 1
        %s213 = smul.addr %s212, 4
        %s214 = scalar_lea.vmem [#allocation5], %s213
        // Predicated region
        $region37: #{tpu_custom_call.1} parent=31 // pred_check
          %p215 = pneg %p84
        $region38: #{tpu_custom_call.1} parent=31 // pred_check_branch
          %217 = sbr.rel (%p215) target = $region40
        $region39: #{tpu_custom_call.1} parent=31 // pred_region
          %218 = dma.done %s211, 64
        $region40: #{tpu_custom_call.1} parent=31 // pred_fallthru
          _
        %s219 = sand.u32 %s45, 1
        %s220 = scalar_lea.sflag [#allocation3], %s219
        %s221 = sand.u32 %s45, 1
        %s222 = smul.addr %s221, 8
        %s223 = scalar_lea.vmem [#allocation2], %s222
        %p224 = pneg %p58
        %p225 = pneg %p55
        %s226 = sand.u32 %s71, 1
        %s227 = scalar_lea.sflag [#allocation6], %s226
        %s228 = sand.u32 %s71, 1
        %s229 = smul.addr %s228, 4
        %s230 = scalar_lea.vmem [#allocation5], %s229
        %p231 = pneg %p84
        %p232 = pneg %p81
        %p233 = pneg %p105
        %p234 = pneg %p102
        %p235 = pneg %p133
        %p236 = pneg %p130
        %s237 = sand.u32 %s120, 1
        %s238 = scalar_lea.sflag [#allocation4], %s237
        %s239 = sand.u32 %s120, 1
        %s240 = smul.addr %s239, 8
        %s241 = scalar_lea.vmem [#allocation7], %s240
        %s242 = smul.u32 2, %s28
        %s243 = smul.u32 2, %s28
        %v244 = vld [vmem:[%s205] sm:$0xff]
        %v245 = vld [vmem:[%s214] sm:$0xf]
        %v246 = vld [vmem:[%s2] sm:$0xf]
        %v248 = vcombine.high %v244, %v244
        %250 = vrot.lane.b32.xlu0 %v244, 1
        %v251 = vpop.permute.xlu0 %250
        %252 = vrot.lane.b32.xlu0 %v248, 1
        %v253 = vpop.permute.xlu0 %252
        %v254 = vlaneseq
        %v255 = vand.u32 %v254, 127
        %vm256 = vcmp.lt.s32.totalorder %v255, 1
        %v257 = vsel %vm256, %v251, %v253
        %v258 = vsel %vm256, %v253, %v251
        %259 = vrot.lane.b32.xlu0 %v244, 127
        %v260 = vpop.permute.xlu0 %259
        %261 = vrot.lane.b32.xlu0 %v248, 127
        %v262 = vpop.permute.xlu0 %261
        %vm263 = vcmp.lt.s32.totalorder %v255, 127
        %v264 = vsel %vm263, %v260, %v262
        %v265 = vsel %vm263, %v262, %v260
        %vm266 = vcmp.eq.s32.totalorder %v246, 0
        %v267 = vsel %vm266, 1, 0
        %v268 = vlaneseq
        %v269 = vshrl.u32 %v268, 7
        %v270 = vsub.s32 0, %v269
        %v271 = vrot.slane %v267, %v270
        %v272 = vlaneseq
        %v273 = vshrl.u32 %v272, 7
        %v274 = vsub.s32 2, %v273
        %v275 = vrot.slane %v267, %v274
        %v276 = vlaneseq
        %v277 = vshrl.u32 %v276, 7
        %v278 = vsub.s32 0, %v277
        %v279 = vrot.slane %v271, %v278
        %v280 = vlaneseq
        %v281 = vshrl.u32 %v280, 7
        %v282 = vsub.s32 0, %v281
        %v283 = vrot.slane %v275, %v282
        %vm284 = vcmp.eq.s32.totalorder %v279, 1
        %vm285 = vcmp.eq.s32.totalorder %v283, 1
        %v286 = vsel %vm284, %v264, %v258
        %v287 = vsel %vm285, %v265, %v257
        %289 = vset.pattern.permute.xlu0 0
        %290 = vperm.xlu0 %289, %v245
        %v291 = vpop.permute.xlu0 %290
        %v293 = vmul.f32 %v286, %v291
        %v294 = vmul.f32 %v287, %v291
        %295 = vset.pattern.permute.xlu0 1
        %296 = vperm.xlu0 %295, %v245
        %v297 = vpop.permute.xlu0 %296
        %v299 = vunpack.c.l.s4 839922192
        %v300 = vunpack.c.0.s8 %v299
        %v301 = vlaneseq
        %v302 = vshrl.u32 %v301, 7
        %v303 = vsub.s32 %v300, %v302
        %v304 = vrot.slane %v297, %v303
        %v306 = vmul.f32 %v244, %v304
        %v308 = vcombine.high %v306, %v306
        %v310 = vadd.f32 %v293, %v306
        %v311 = vadd.f32 %v294, %v308
        %vm312 = vcmp.eq.s32.totalorder %v246, 15
        %v313 = vsel %vm312, 1, 0
        %v314 = vlaneseq
        %v315 = vshrl.u32 %v314, 7
        %v316 = vsub.s32 0, %v315
        %v317 = vrot.slane %v313, %v316
        %v318 = vlaneseq
        %v319 = vshrl.u32 %v318, 7
        %v320 = vsub.s32 2, %v319
        %v321 = vrot.slane %v313, %v320
        %v322 = vlaneseq
        %v323 = vshrl.u32 %v322, 7
        %v324 = vsub.s32 0, %v323
        %v325 = vrot.slane %v317, %v324
        %v326 = vlaneseq
        %v327 = vshrl.u32 %v326, 7
        %v328 = vsub.s32 0, %v327
        %v329 = vrot.slane %v321, %v328
        %vm330 = vcmp.eq.s32.totalorder %v325, 1
        %vm331 = vcmp.eq.s32.totalorder %v329, 1
        %v332 = vsel %vm330, %v258, %v264
        %v333 = vsel %vm331, %v257, %v265
        %334 = vset.pattern.permute.xlu0 2
        %335 = vperm.xlu0 %334, %v245
        %v336 = vpop.permute.xlu0 %335
        %v338 = vmul.f32 %v332, %v336
        %v339 = vmul.f32 %v333, %v336
        %v340 = vadd.f32 %v310, %v338
        %v341 = vadd.f32 %v311, %v339
        %v342 = vlaneseq
        %v343 = vshrl.u32 %v342, 7
        %v344 = vadd.s32 %v343, 8
        %v345 = vlaneseq
        %v346 = vshrl.u32 %v345, 7
        %v347 = vsub.s32 1, %v346
        %v348 = vrot.slane %v246, %v347
        %v349 = vlaneseq
        %v350 = vshrl.u32 %v349, 7
        %v351 = vsub.s32 3, %v350
        %v352 = vrot.slane %v246, %v351
        %v353 = vlaneseq
        %v354 = vshrl.u32 %v353, 7
        %v355 = vsub.s32 1, %v354
        %v356 = vrot.slane %v348, %v355
        %v357 = vlaneseq
        %v358 = vshrl.u32 %v357, 7
        %v359 = vsub.s32 1, %v358
        %v360 = vrot.slane %v352, %v359
        %vm361 = vcmp.eq.s32.totalorder %v343, %v356
        %vm362 = vcmp.eq.s32.totalorder %v343, %v360
        %vm363 = vcmp.eq.s32.totalorder %v344, %v356
        %vm364 = vcmp.eq.s32.totalorder %v344, %v360
        %v365 = vsel %vm361, 1, 0
        %v366 = vsel %vm362, 1, 0
        %v367 = vsel %vm363, 1, 0
        %v368 = vsel %vm364, 1, 0
        %v369 = vcvt.s32.f32 %v365
        %v370 = vcvt.s32.f32 %v366
        %v371 = vcvt.s32.f32 %v367
        %v372 = vcvt.s32.f32 %v368
        %373 = vmatprep.subr.mxu0 %v370
        %374 = vmatpush1.xpose.msra.mxu0 %v369
        %375 = vmatprep.subr.mxu0 %v372
        %376 = vmatpush1.xpose.msra.mxu0 %v371
        %377 = vmatprep.subr.mxu0 0.0
        %378 = vmatpush1.xpose.msra.mxu0 0.0
        %379 = vmatprep.subr.mxu0 0.0
        %380 = vmatpush1.xpose.msra.mxu0 0.0
        %381 = vmatprep.subr.mxu0 0.0
        %382 = vmatpush1.xpose.msra.mxu0 0.0
        %383 = vmatprep.subr.mxu0 0.0
        %384 = vmatpush1.xpose.msra.mxu0 0.0
        %385 = vmatprep.subr.mxu0 0.0
        %386 = vmatpush1.xpose.msra.mxu0 0.0
        %387 = vmatprep.subr.mxu0 0.0
        %388 = vmatpush1.xpose.msra.mxu0 0.0
        %389 = vmatprep.subr.mxu0 0.0
        %390 = vmatpush1.xpose.msra.mxu0 0.0
        %391 = vmatprep.subr.mxu0 0.0
        %392 = vmatpush1.xpose.msra.mxu0 0.0
        %393 = vmatprep.subr.mxu0 0.0
        %394 = vmatpush1.xpose.msra.mxu0 0.0
        %395 = vmatprep.subr.mxu0 0.0
        %396 = vmatpush1.xpose.msra.mxu0 0.0
        %397 = vmatprep.subr.mxu0 0.0
        %398 = vmatpush1.xpose.msra.mxu0 0.0
        %399 = vmatprep.subr.mxu0 0.0
        %400 = vmatpush1.xpose.msra.mxu0 0.0
        %401 = vmatprep.subr.mxu0 0.0
        %402 = vmatpush1.xpose.msra.mxu0 0.0
        %403 = vmatprep.subr.mxu0 0.0
        %404 = vmatpush1.xpose.msra.mxu0 0.0
        %405 = vmatprep.subr.mxu0 0.0
        %406 = vmatpush1.xpose.msra.mxu0 0.0
        %407 = vmatprep.subr.mxu0 0.0
        %408 = vmatpush1.xpose.msra.mxu0 0.0
        %409 = vmatprep.subr.mxu0 0.0
        %410 = vmatpush1.xpose.msra.mxu0 0.0
        %411 = vmatprep.subr.mxu0 0.0
        %412 = vmatpush1.xpose.msra.mxu0 0.0
        %413 = vmatprep.subr.mxu0 0.0
        %414 = vmatpush1.xpose.msra.mxu0 0.0
        %415 = vmatprep.subr.mxu0 0.0
        %416 = vmatpush1.xpose.msra.mxu0 0.0
        %417 = vmatprep.subr.mxu0 0.0
        %418 = vmatpush1.xpose.msra.mxu0 0.0
        %419 = vmatprep.subr.mxu0 0.0
        %420 = vmatpush1.xpose.msra.mxu0 0.0
        %421 = vmatprep.subr.mxu0 0.0
        %422 = vmatpush1.xpose.msra.mxu0 0.0
        %423 = vmatprep.subr.mxu0 0.0
        %424 = vmatpush1.xpose.msra.mxu0 0.0
        %425 = vmatprep.subr.mxu0 0.0
        %426 = vmatpush1.xpose.msra.mxu0 0.0
        %427 = vmatprep.subr.mxu0 0.0
        %428 = vmatpush1.xpose.msra.mxu0 0.0
        %429 = vmatprep.subr.mxu0 0.0
        %430 = vmatpush1.xpose.msra.mxu0 0.0
        %431 = vmatprep.subr.mxu0 0.0
        %432 = vmatpush1.xpose.msra.mxu0 0.0
        %433 = vmatprep.subr.mxu0 0.0
        %434 = vmatpush1.xpose.msra.mxu0 0.0
        %435 = vmatprep.subr.mxu0 0.0
        %436 = vmatpush1.xpose.msra.mxu0 0.0
        %437 = vmatprep.mubr.f32.mxu0 %v248
        %438 = vmatmul.mubr.f32.gmra.mrb[0].mxu0 %v244
        %v439 = vpop.f32.mrb[0].mxu0
        %v440 = vadd.f32 0.0, %v439
        %v441 = vpop.f32.mrb[0].mxu0
        %442 = vdwg.mxu0
        %443 = vset.pattern.permute.xlu0 3
        %444 = vperm.xlu0 %443, %v245
        %v445 = vpop.permute.xlu0 %444
        %v447 = vmul.f32 %v440, %v445
        %vm448 = vcmask 130048
        %v450 = vsel %vm448, %v447, 0
        %452 = vmatprep.subr.mxu0 %v370
        %453 = vmatpush1.msra.mxu0 %v369
        %454 = vmatprep.subr.mxu0 %v372
        %455 = vmatpush1.msra.mxu0 %v371
        %456 = vmatprep.subr.mxu0 0.0
        %457 = vmatpush1.msra.mxu0 0.0
        %458 = vmatprep.subr.mxu0 0.0
        %459 = vmatpush1.msra.mxu0 0.0
        %460 = vmatprep.subr.mxu0 0.0
        %461 = vmatpush1.msra.mxu0 0.0
        %462 = vmatprep.subr.mxu0 0.0
        %463 = vmatpush1.msra.mxu0 0.0
        %464 = vmatprep.subr.mxu0 0.0
        %465 = vmatpush1.msra.mxu0 0.0
        %466 = vmatprep.subr.mxu0 0.0
        %467 = vmatpush1.msra.mxu0 0.0
        %468 = vmatprep.subr.mxu0 0.0
        %469 = vmatpush1.msra.mxu0 0.0
        %470 = vmatprep.subr.mxu0 0.0
        %471 = vmatpush1.msra.mxu0 0.0
        %472 = vmatprep.subr.mxu0 0.0
        %473 = vmatpush1.msra.mxu0 0.0
        %474 = vmatprep.subr.mxu0 0.0
        %475 = vmatpush1.msra.mxu0 0.0
        %476 = vmatprep.subr.mxu0 0.0
        %477 = vmatpush1.msra.mxu0 0.0
        %478 = vmatprep.subr.mxu0 0.0
        %479 = vmatpush1.msra.mxu0 0.0
        %480 = vmatprep.subr.mxu0 0.0
        %481 = vmatpush1.msra.mxu0 0.0
        %482 = vmatprep.subr.mxu0 0.0
        %483 = vmatpush1.msra.mxu0 0.0
        %484 = vmatprep.subr.mxu0 0.0
        %485 = vmatpush1.msra.mxu0 0.0
        %486 = vmatprep.subr.mxu0 0.0
        %487 = vmatpush1.msra.mxu0 0.0
        %488 = vmatprep.subr.mxu0 0.0
        %489 = vmatpush1.msra.mxu0 0.0
        %490 = vmatprep.subr.mxu0 0.0
        %491 = vmatpush1.msra.mxu0 0.0
        %492 = vmatprep.subr.mxu0 0.0
        %493 = vmatpush1.msra.mxu0 0.0
        %494 = vmatprep.subr.mxu0 0.0
        %495 = vmatpush1.msra.mxu0 0.0
        %496 = vmatprep.subr.mxu0 0.0
        %497 = vmatpush1.msra.mxu0 0.0
        %498 = vmatprep.subr.mxu0 0.0
        %499 = vmatpush1.msra.mxu0 0.0
        %500 = vmatprep.subr.mxu0 0.0
        %501 = vmatpush1.msra.mxu0 0.0
        %502 = vmatprep.subr.mxu0 0.0
        %503 = vmatpush1.msra.mxu0 0.0
        %504 = vmatprep.subr.mxu0 0.0
        %505 = vmatpush1.msra.mxu0 0.0
        %506 = vmatprep.subr.mxu0 0.0
        %507 = vmatpush1.msra.mxu0 0.0
        %508 = vmatprep.subr.mxu0 0.0
        %509 = vmatpush1.msra.mxu0 0.0
        %510 = vmatprep.subr.mxu0 0.0
        %511 = vmatpush1.msra.mxu0 0.0
        %512 = vmatprep.subr.mxu0 0.0
        %513 = vmatpush1.msra.mxu0 0.0
        %514 = vmatprep.subr.mxu0 0.0
        %515 = vmatpush1.msra.mxu0 0.0
        %516 = vmatprep.mubr.f32.mxu0 0.0
        %517 = vmatmul.mubr.f32.gmra.mrb[0].mxu0 %v450
        %v518 = vpop.f32.mrb[0].mxu0
        %v519 = vadd.f32 0.0, %v518
        %v520 = vpop.f32.mrb[0].mxu0
        %v521 = vadd.f32 0.0, %v520
        %522 = vdwg.mxu0
        %v523 = vsub.f32 %v340, %v519
        %v524 = vsub.f32 %v341, %v521
        %v527 = vcombine.low %v523, %v524
        %529 = vst [vmem:[%s241] sm:$0xff] %v527
        %s530 = sand.u32 %s120, 1
        %s531 = scalar_lea.sflag [#allocation4], %s530
        %s532 = sand.u32 %s120, 1
        %s533 = smul.addr %s532, 8
        %s534 = scalar_lea.vmem [#allocation7], %s533
        // Predicated region
        $region41: #{tpu_custom_call.1} parent=31 // pred_check
          %p535 = pneg %p130
        $region42: #{tpu_custom_call.1} parent=31 // pred_check_branch
          %537 = sbr.rel (%p535) target = $region44
        $region43: #{tpu_custom_call.1} parent=31 // pred_region
          %s538 = smul.u32 2, %s28
          %s540 = ssub.s32 128, 128
          %541 = vsyncadd %s531, %s540
          %s542 = smul.addr %s27, 2
          %s543 = sadd.s32 %s538, %s542
          %s544 = smul.addr %s543, 64
          %s545 = scalar_lea.hbm %s3, %s544
          %s547 = sshll.u32 %s534, 4
          %s548 = int_to_ptr.vmem [resolvable:$true] %s547
          %550 = dma.vmem_to_hbm [thread:$0]  %s548, 128, %s545, %s531
        $region44: #{tpu_custom_call.1} parent=31 // pred_fallthru
          _
      $region32: #{tpu_custom_call.1} parent=5 // pred_fallthru
        _
      %p551 = scmp.le.s32.totalorder 2, %s18
      // Predicated region
      $region45: #{tpu_custom_call.1} parent=5 // pred_check
        %p552 = pneg %p551
      $region46: #{tpu_custom_call.1} parent=5 // pred_check_branch
        %554 = sbr.rel (%p552) target = $region48
      $region47: #{tpu_custom_call.1} parent=5 // pred_region
        %s555 = ssub.s32 %s18, 2
        // Predicated region
        $region49: #{tpu_custom_call.1} parent=47 // pred_check
          %p556 = pneg %p136
        $region50: #{tpu_custom_call.1} parent=47 // pred_check_branch
          %558 = sbr.rel (%p556) target = $region52
        $region51: #{tpu_custom_call.1} parent=47 // pred_region
          %s559 = sand.u32 %s121, 1
          %s560 = scalar_lea.sflag [#allocation4], %s559
          %s561 = sand.u32 %s121, 1
          %s562 = smul.addr %s561, 8
          %s563 = scalar_lea.vmem [#allocation7], %s562
          %564 = dma.done %s560, 128
        $region52: #{tpu_custom_call.1} parent=47 // pred_fallthru
          _
      $region48: #{tpu_custom_call.1} parent=5 // pred_fallthru
        _
    $region6: #{tpu_custom_call.1} parent=1 // loop_footer
      %s22 = sadd.s32 1, %s18
    $region7: #{tpu_custom_call.1} parent=1 // loop_footer_branch
      %17 = sbr.rel target = $region3
    $region8: #{tpu_custom_call.1} parent=1 // loop_exit
      _
    %565 = vsyncpa [#allocation3], 1
    %s566 = scalar_lea.sflag [#allocation3], 1
    %567 = vsyncpa %s566, 1
    %568 = vsyncpa [#allocation6], 1
    %s569 = scalar_lea.sflag [#allocation6], 1
    %570 = vsyncpa %s569, 1
    %571 = vsyncpa [#allocation4], 1
    %s572 = scalar_lea.sflag [#allocation4], 1
    %573 = vsyncpa %s572, 1

</llo_original>
